<compile_context>
chip_gen: v7x
topology: tpu7x:2x2x1
jax: 0.10.0
libtpu: 0.0.40
codegen_flags: <defaults>
</compile_context>

<pallas_src>
import functools

import jax
import jax.numpy as jnp
from jax.experimental import pallas as pl
from jax.experimental.pallas import tpu as pltpu


def _round_up(x: int, m: int) -> int:
    return ((x + m - 1) // m) * m


def _vmem_capacity_bytes() -> int:
    try:
        return int(pltpu.get_tpu_info().vmem_capacity_bytes)
    except Exception:
        # Conservative fallback: v7x per-TensorCore VMEM.
        return 64 * 1024 * 1024


_VMEM_CAP = _vmem_capacity_bytes()


def neuronet1_kernel(x_ref, w1_ref, b1_ref, w2_ref, b2_ref, o_ref):
    # x_ref: [TB, In] f32 -- read once from HBM, cast to bf16 on the VPU here
    # (cheaper than a wrapper pad/cast pass over the whole activation tensor).
    x = x_ref[...].astype(w1_ref.dtype)                       # f32 -> bf16
    h = jnp.dot(x, w1_ref[...],
                preferred_element_type=jnp.float32)           # [TB, H_p] f32
    h = jnp.maximum(h + b1_ref[...], 0.0)                     # bias + ReLU (f32)
    h = h.astype(w2_ref.dtype)                                # bf16 for 2nd MXU pass
    o = jnp.dot(h, w2_ref[...],
                preferred_element_type=jnp.float32)           # [TB, C_out] f32
    o_ref[...] = (o + b2_ref[...]).astype(o_ref.dtype)


def _per_step_bytes(tb: int, in_dim: int, h_p: int, c_out: int) -> int:
    """VMEM consumed per batch tile (double-buffered x/out + intermediates)."""
    return (2 * tb * in_dim * 4        # double-buffered f32 x tiles
            + tb * in_dim * 2          # in-kernel bf16 copy of x
            + tb * h_p * (4 + 2)       # f32 hidden + bf16 hidden copy
            + 2 * tb * c_out * 4)      # double-buffered f32 out tiles


def _choose_tb(b8, in_dim, h_p, c_out, *, tb_max, budget_bytes, weight_bytes):
    tb = max(8, min(tb_max, _round_up(b8, 8)))
    tb = (tb // 8) * 8
    # Fit against the VMEM budget (weights already counted double-buffered).
    while tb > 8 and weight_bytes + _per_step_bytes(tb, in_dim, h_p, c_out) > budget_bytes:
        tb = max(8, ((tb // 2) // 8) * 8)
    # Prefer MXU-friendly M-dim multiples: 256 on v6e/v7x (also 128-aligned,
    # so it's fine for v5e's 128-wide MXU), else 128, else 8.
    if tb >= 256:
        tb = (tb // 256) * 256
    elif tb >= 128:
        tb = (tb // 128) * 128
    # Megacore: v7x has 2 TensorCores; guarantee >=2 grid steps along the
    # "parallel" batch axis whenever there is enough batch.  Costs at most one
    # ~0.35us extra step on single-TC parts, gains up to ~2x on v7x.
    if b8 >= 16:
        tb = min(tb, _round_up((b8 + 1) // 2, 8))
    return max(8, tb)


@functools.partial(jax.jit, static_argnames=("tb_max",))
def neuronet1_forward(x, w1, b1, w2, b2, *, tb_max=None):
    """x: [B, In] f32; w1: [In, H]; b1: [1, H]; w2: [H, C]; b2: [1, C]."""
    B, In = x.shape
    H = w1.shape[1]
    C = w2.shape[1]

    mm_dtype = jnp.bfloat16
    H_p = _round_up(H, 128)
    C_p = _round_up(C, 128)
    # Output lane policy: lane-dense (padded) stores unless padding would more
    # than double the f32 writeback (e.g. C=8 -> keep C unpadded, masked vst).
    C_out = C_p if 2 * C > C_p else C

    cap = _VMEM_CAP
    budget = (cap * 3) // 4            # ~48 MiB on v7x, ~96 MiB on v5e/v6e
    if tb_max is None:
        tb_max = 512 if cap >= (96 << 20) else 256

    # Resident weights/biases counted at 2x: Pallas allocates two buffers per
    # input BlockSpec even with a constant index_map.
    weight_bytes = 2 * (In * H_p * 2 + H_p * C_out * 2 + H_p * 4 + C_out * 4)
    # NOTE: for layers whose weights alone exceed the VMEM budget, a K(In)/N(H)
    # grid axis with a pl.when-guarded f32 accumulator would be needed; not
    # required at these model sizes.

    B8 = _round_up(B, 8)
    TB = _choose_tb(B8, In, H_p, C_out, tb_max=tb_max,
                    budget_bytes=budget, weight_bytes=weight_bytes)
    B_pad = _round_up(B8, TB)
    grid = (B_pad // TB,)

    # x goes straight through (f32, unpadded features); pad batch only if the
    # tile does not divide it (zero rows are exact and sliced off afterwards).
    xp = x if B_pad == B else jnp.pad(x, ((0, B_pad - B), (0, 0)))

    # Tiny, one-time weight/bias pads (zeros are exact through Linear/ReLU).
    w1p = jnp.zeros((In, H_p), mm_dtype).at[:, :H].set(w1.astype(mm_dtype))
    b1p = jnp.zeros((1, H_p), jnp.float32).at[:, :H].set(b1.astype(jnp.float32))
    w2p = jnp.zeros((H_p, C_out), mm_dtype).at[:H, :C].set(w2.astype(mm_dtype))
    b2p = jnp.zeros((1, C_out), jnp.float32).at[:, :C].set(b2.astype(jnp.float32))

    needed = weight_bytes + _per_step_bytes(TB, In, H_p, C_out)
    vmem_limit = int(min(cap - (8 << 20), max(needed + (4 << 20), 16 << 20)))

    cost = pl.CostEstimate(
        flops=2 * B_pad * In * H_p + 2 * B_pad * H_p * C_out,
        transcendentals=0,
        bytes_accessed=(B_pad * In * 4            # x read (f32, once)
                        + In * H_p * 2            # w1 (bf16)
                        + H_p * C_out * 2         # w2 (bf16)
                        + (H_p + C_out) * 4       # biases (f32)
                        + B_pad * C_out * 4))     # out write (f32)

    out = pl.pallas_call(
        neuronet1_kernel,
        out_shape=jax.ShapeDtypeStruct((B_pad, C_out), jnp.float32),
        grid=grid,
        in_specs=[
            pl.BlockSpec((TB, In), lambda i: (i, 0)),       # x: batch-tiled, f32
            pl.BlockSpec((In, H_p), lambda i: (0, 0)),      # w1: resident
            pl.BlockSpec((1, H_p), lambda i: (0, 0)),       # b1: resident
            pl.BlockSpec((H_p, C_out), lambda i: (0, 0)),   # w2: resident
            pl.BlockSpec((1, C_out), lambda i: (0, 0)),     # b2: resident
        ],
        out_specs=pl.BlockSpec((TB, C_out), lambda i: (i, 0)),
        compiler_params=pltpu.CompilerParams(
            dimension_semantics=("parallel",),
            vmem_limit_bytes=vmem_limit),
        cost_estimate=cost,
    )(xp, w1p, b1p, w2p, b2p)

    if B_pad != B or C_out != C:
        out = out[:B, :C]
    return out


def reference_forward(x, w1, b1, w2, b2):
    h = jnp.maximum(x @ w1 + b1, 0.0)
    return h @ w2 + b2


if __name__ == "__main__":
    # Small shapes consistent with NeuroNet1(input_size, hidden_size, num_class)
    batch, input_size, hidden_size, num_class = 8, 64, 32, 8

    key = jax.random.PRNGKey(0)
    kx, kw1, kb1, kw2, kb2 = jax.random.split(key, 5)

    x = jax.random.normal(kx, (batch, input_size), dtype=jnp.float32)

    # Deterministic parameter init (mimics nn.Linear uniform(-1/sqrt(in), 1/sqrt(in)))
    lim1 = 1.0 / jnp.sqrt(jnp.float32(input_size))
    lim2 = 1.0 / jnp.sqrt(jnp.float32(hidden_size))
    w1 = jax.random.uniform(kw1, (input_size, hidden_size), jnp.float32, -lim1, lim1)
    b1 = jax.random.uniform(kb1, (1, hidden_size), jnp.float32, -lim1, lim1)
    w2 = jax.random.uniform(kw2, (hidden_size, num_class), jnp.float32, -lim2, lim2)
    b2 = jax.random.uniform(kb2, (1, num_class), jnp.float32, -lim2, lim2)

    y = neuronet1_forward(x, w1, b1, w2, b2)
    y = jax.block_until_ready(y)

    y_ref = reference_forward(x, w1, b1, w2, b2)
    assert y.shape == (batch, num_class)
    # bf16 matmul inputs with f32 accumulation -> loosened tolerance vs pure f32.
    assert jnp.allclose(y, y_ref, atol=3e-2, rtol=3e-2), (
        float(jnp.max(jnp.abs(y - y_ref))))

    print("KERNEL_OK")
</pallas_src>

<mosaic_0001>
module attributes {stable_mosaic.version = 11 : i64} {
  func.func @neuronet1_kernel(%arg0: i32, %arg1: memref<8x64xf32, #tpu.memory_space<vmem>>, %arg2: memref<64x128xbf16, #tpu.memory_space<vmem>>, %arg3: memref<1x128xf32, #tpu.memory_space<vmem>>, %arg4: memref<128x8xbf16, #tpu.memory_space<vmem>>, %arg5: memref<1x8xf32, #tpu.memory_space<vmem>>, %arg6: memref<8x8xf32, #tpu.memory_space<vmem>>) attributes {dimension_semantics = [#tpu.dimension_semantics<parallel>], iteration_bounds = array<i64: 1>, scalar_prefetch = 0 : i64, scratch_operands = 0 : i64, tpu.core_type = #tpu.core_type<tc>, window_params = [{transform_indices = @transform_0, window_bounds = array<i64: 8, 64>}, {pipeline_mode = #tpu.pipeline_mode<synchronous>, transform_indices = @transform_1, window_bounds = array<i64: 64, 128>}, {pipeline_mode = #tpu.pipeline_mode<synchronous>, transform_indices = @transform_2, window_bounds = array<i64: 1, 128>}, {pipeline_mode = #tpu.pipeline_mode<synchronous>, transform_indices = @transform_3, window_bounds = array<i64: 128, 8>}, {pipeline_mode = #tpu.pipeline_mode<synchronous>, transform_indices = @transform_4, window_bounds = array<i64: 1, 8>}, {transform_indices = @transform_5, window_bounds = array<i64: 8, 8>}]} {
    %c0 = arith.constant 0 : index
    %c0_0 = arith.constant 0 : index
    %0 = vector.load %arg1[%c0, %c0_0] : memref<8x64xf32, #tpu.memory_space<vmem>>, vector<8x64xf32>
    %1 = arith.truncf %0 : vector<8x64xf32> to vector<8x64xbf16>
    %c0_1 = arith.constant 0 : index
    %c0_2 = arith.constant 0 : index
    %2 = vector.load %arg2[%c0_1, %c0_2] : memref<64x128xbf16, #tpu.memory_space<vmem>>, vector<64x128xbf16>
    %cst = arith.constant dense<0.000000e+00> : vector<8x128xf32>
    %3 = tpu.matmul %1, %2, %cst {dimension_numbers = #tpu.dot_dimension_numbers<[1], [0], [0], [1], [0, 0, 1, 1], [], []>} : vector<8x64xbf16>, vector<64x128xbf16>, vector<8x128xf32> -> vector<8x128xf32>
    %c0_3 = arith.constant 0 : index
    %c0_4 = arith.constant 0 : index
    %4 = vector.load %arg3[%c0_3, %c0_4] : memref<1x128xf32, #tpu.memory_space<vmem>>, vector<1x128xf32>
    %5 = vector.broadcast %4 : vector<1x128xf32> to vector<8x128xf32>
    %6 = arith.addf %3, %5 : vector<8x128xf32>
    %cst_5 = arith.constant 0.000000e+00 : f32
    %7 = vector.broadcast %cst_5 : f32 to vector<8x128xf32>
    %8 = arith.maximumf %6, %7 : vector<8x128xf32>
    %9 = arith.truncf %8 : vector<8x128xf32> to vector<8x128xbf16>
    %c0_6 = arith.constant 0 : index
    %c0_7 = arith.constant 0 : index
    %10 = vector.load %arg4[%c0_6, %c0_7] : memref<128x8xbf16, #tpu.memory_space<vmem>>, vector<128x8xbf16>
    %cst_8 = arith.constant dense<0.000000e+00> : vector<8x8xf32>
    %11 = tpu.matmul %9, %10, %cst_8 {dimension_numbers = #tpu.dot_dimension_numbers<[1], [0], [0], [1], [0, 0, 1, 1], [], []>} : vector<8x128xbf16>, vector<128x8xbf16>, vector<8x8xf32> -> vector<8x8xf32>
    %c0_9 = arith.constant 0 : index
    %c0_10 = arith.constant 0 : index
    %12 = vector.load %arg5[%c0_9, %c0_10] : memref<1x8xf32, #tpu.memory_space<vmem>>, vector<1x8xf32>
    %13 = vector.broadcast %12 : vector<1x8xf32> to vector<8x8xf32>
    %14 = arith.addf %11, %13 : vector<8x8xf32>
    %c0_11 = arith.constant 0 : index
    %c0_12 = arith.constant 0 : index
    %15 = vector.load %arg6[%c0_11, %c0_12] : memref<8x8xf32, #tpu.memory_space<vmem>>, vector<8x8xf32>
    tpu.vector_store %arg6[%c0_11, %c0_12], %14 {strides = array<i32>} : memref<8x8xf32, #tpu.memory_space<vmem>>, vector<8x8xf32>,
    return
  }
  func.func @transform_0(%arg0: i32) -> (i32, i32) {
    %c0_i32 = arith.constant 0 : i32
    %c0_i32_0 = arith.constant 0 : i32
    return %arg0, %c0_i32 : i32, i32
  }
  func.func @transform_1(%arg0: i32) -> (i32, i32) {
    %c0_i32 = arith.constant 0 : i32
    %c0_i32_0 = arith.constant 0 : i32
    %c0_i32_1 = arith.constant 0 : i32
    return %c0_i32, %c0_i32_0 : i32, i32
  }
  func.func @transform_2(%arg0: i32) -> (i32, i32) {
    %c0_i32 = arith.constant 0 : i32
    %c0_i32_0 = arith.constant 0 : i32
    %c0_i32_1 = arith.constant 0 : i32
    return %c0_i32, %c0_i32_0 : i32, i32
  }
  func.func @transform_3(%arg0: i32) -> (i32, i32) {
    %c0_i32 = arith.constant 0 : i32
    %c0_i32_0 = arith.constant 0 : i32
    %c0_i32_1 = arith.constant 0 : i32
    return %c0_i32, %c0_i32_0 : i32, i32
  }
  func.func @transform_4(%arg0: i32) -> (i32, i32) {
    %c0_i32 = arith.constant 0 : i32
    %c0_i32_0 = arith.constant 0 : i32
    %c0_i32_1 = arith.constant 0 : i32
    return %c0_i32, %c0_i32_0 : i32, i32
  }
  func.func @transform_5(%arg0: i32) -> (i32, i32) {
    %c0_i32 = arith.constant 0 : i32
    %c0_i32_0 = arith.constant 0 : i32
    return %arg0, %c0_i32 : i32, i32
  }
}

</mosaic_0001>

<llo_original>
// kernel: neuronet1_forward.1
$region0: #{neuronet1_forward.1}
  #allocation0 [shape = 'u32[]', space=smem, size = 0x4, offset = 0x4, fixed_abs, tag = 'smem constant byte address 0x4 - core index']
  #allocation1 [shape = 'u32[144,128]{1,0:T(1,128)}', space=vmem, size = 0x12000, scoped, tag = 'internal scratch']
  %s0 = inlined_call_operand.vmem [shape: f32[8,64], index: 0, kind: input, shape index: {}]
  %s1 = inlined_call_operand.vmem [shape: bf16[64,128], index: 1, kind: input, shape index: {}]
  %s2 = inlined_call_operand.vmem [shape: f32[1,128], index: 2, kind: input, shape index: {}]
  %s3 = inlined_call_operand.vmem [shape: bf16[128,8], index: 3, kind: input, shape index: {}]
  %s4 = inlined_call_operand.vmem [shape: f32[1,8], index: 4, kind: input, shape index: {}]
  %s5 = inlined_call_operand.hbm [shape: f32[8,8], index: 5, kind: output, shape index: {}]
  %s6 = sld [smem:[#allocation0]]
  $region30: #{neuronet1_forward.1} parent=0
    _
  %s8 = ssub.s32 1, %s6
  %s9 = scalar_select 0, %s8, %s6
  $region1: #{neuronet1_forward.1} parent=0
    #allocation2 [shape = 'u8[4096]{0}', space=vmem, size = 0x1000, scoped, tag = 'output window, operand 0, single buffered']
    #allocation3 [shape = 's32[1]{0}', space=sflag, size = 0x4, scoped, tag = 'scoped memory for neuronet1_forward.1']
    %10 = vsyncpa [#allocation3], 0
    // Predicated region
    $region2: #{neuronet1_forward.1} parent=1 // pred_check
      _
    $region3: #{neuronet1_forward.1} parent=1 // pred_check_branch
      %12 = sbr.rel (0) target = $region5
    $region4: #{neuronet1_forward.1} parent=1 // pred_region
      _
    $region5: #{neuronet1_forward.1} parent=1 // pred_fallthru
      _
    // Predicated region
    $region6: #{neuronet1_forward.1} parent=1 // pred_check
      _
    $region7: #{neuronet1_forward.1} parent=1 // pred_check_branch
      %14 = sbr.rel (0) target = $region9
    $region8: #{neuronet1_forward.1} parent=1 // pred_region
      _
    $region9: #{neuronet1_forward.1} parent=1 // pred_fallthru
      _
    // Predicated region
    $region10: #{neuronet1_forward.1} parent=1 // pred_check
      _
    $region11: #{neuronet1_forward.1} parent=1 // pred_check_branch
      %16 = sbr.rel (0) target = $region13
    $region12: #{neuronet1_forward.1} parent=1 // pred_region
      _
    $region13: #{neuronet1_forward.1} parent=1 // pred_fallthru
      _
    // Predicated region
    $region14: #{neuronet1_forward.1} parent=1 // pred_check
      _
    $region15: #{neuronet1_forward.1} parent=1 // pred_check_branch
      %18 = sbr.rel (0) target = $region17
    $region16: #{neuronet1_forward.1} parent=1 // pred_region
      _
    $region17: #{neuronet1_forward.1} parent=1 // pred_fallthru
      _
    // Predicated region
    $region18: #{neuronet1_forward.1} parent=1 // pred_check
      _
    $region19: #{neuronet1_forward.1} parent=1 // pred_check_branch
      %20 = sbr.rel (0) target = $region21
    $region20: #{neuronet1_forward.1} parent=1 // pred_region
      _
    $region21: #{neuronet1_forward.1} parent=1 // pred_fallthru
      _
    %v22 = vld [vmem:[%s0] sm:$0xff]
    %v23 = vpack.c.bf16 %v22, %v22
    %v24 = vld [vmem:[%s1] sm:$0xf]
    %v25 = vld [vmem:[%s1 + $0x4] sm:$0xf]
    %v26 = vld [vmem:[%s1 + $0x8] sm:$0xf]
    %v27 = vld [vmem:[%s1 + $0xc] sm:$0xf]
    %v28 = vld [vmem:[%s1 + $0x10] sm:$0xf]
    %v29 = vld [vmem:[%s1 + $0x14] sm:$0xf]
    %v30 = vld [vmem:[%s1 + $0x18] sm:$0xf]
    %v31 = vld [vmem:[%s1 + $0x1c] sm:$0xf]
    %v32 = vld [vmem:[%s2] sm:$0x1]
    %v34 = vlaneseq
    %v35 = vshrl.u32 %v34, 7
    %v36 = vsub.s32 0, %v35
    %v37 = vrot.slane %v32, %v36
    %v47 = vunpack.c.l.b16 %v24
    %v48 = vunpack.c.l.b16 %v25
    %v49 = vunpack.c.l.b16 %v26
    %v50 = vunpack.c.l.b16 %v27
    %v51 = vunpack.c.l.b16 %v28
    %v52 = vunpack.c.l.b16 %v29
    %v53 = vunpack.c.l.b16 %v30
    %v54 = vunpack.c.l.b16 %v31
    %v55 = vpack.c.b16 %v48, %v47
    %v56 = vpack.c.b16 %v50, %v49
    %v57 = vpack.c.b16 %v52, %v51
    %v58 = vpack.c.b16 %v54, %v53
    %vm63 = vcmask 523264
    %v65 = vsel %vm63, %v23, 0
    %67 = vmatprep.subr.bf16.mxu0 0
    %68 = vmatpush1.bf16.msra.mxu0 %v55
    %69 = vmatprep.subr.bf16.mxu0 0
    %70 = vmatpush1.bf16.msra.mxu0 %v56
    %71 = vmatprep.subr.bf16.mxu0 0
    %72 = vmatpush1.bf16.msra.mxu0 %v57
    %73 = vmatprep.subr.bf16.mxu0 0
    %74 = vmatpush1.bf16.msra.mxu0 %v58
    %75 = vmatprep.subr.bf16.mxu0 0
    %76 = vmatpush1.bf16.msra.mxu0 0
    %77 = vmatprep.subr.bf16.mxu0 0
    %78 = vmatpush1.bf16.msra.mxu0 0
    %79 = vmatprep.subr.bf16.mxu0 0
    %80 = vmatpush1.bf16.msra.mxu0 0
    %81 = vmatprep.subr.bf16.mxu0 0
    %82 = vmatpush1.bf16.msra.mxu0 0
    %83 = vmatprep.subr.bf16.mxu0 0
    %84 = vmatpush1.bf16.msra.mxu0 0
    %85 = vmatprep.subr.bf16.mxu0 0
    %86 = vmatpush1.bf16.msra.mxu0 0
    %87 = vmatprep.subr.bf16.mxu0 0
    %88 = vmatpush1.bf16.msra.mxu0 0
    %89 = vmatprep.subr.bf16.mxu0 0
    %90 = vmatpush1.bf16.msra.mxu0 0
    %91 = vmatprep.subr.bf16.mxu0 0
    %92 = vmatpush1.bf16.msra.mxu0 0
    %93 = vmatprep.subr.bf16.mxu0 0
    %94 = vmatpush1.bf16.msra.mxu0 0
    %95 = vmatprep.subr.bf16.mxu0 0
    %96 = vmatpush1.bf16.msra.mxu0 0
    %97 = vmatprep.subr.bf16.mxu0 0
    %98 = vmatpush1.bf16.msra.mxu0 0
    %99 = vmatprep.mubr.bf16.mxu0 0
    %100 = vmatmul.mubr.bf16.gmra.mrb[0].mxu0 %v65
    %v101 = vpop.f32.mrb[0].mxu0
    %v102 = vadd.f32 %v37, %v101
    %v103 = vpop.f32.mrb[0].mxu0
    %v104 = vpop.f32.mrb[0].mxu0
    %v105 = vpop.f32.mrb[0].mxu0
    %106 = vdwg.mxu0
    %v107 = vmax.f32 %v102, 0.0
    %v108 = vpack.c.bf16 %v107, %v107
    %v109 = vld [vmem:[%s3] sm:$0xf]
    %v110 = vld [vmem:[%s3 + $0x4] sm:$0xf]
    %v111 = vld [vmem:[%s3 + $0x8] sm:$0xf]
    %v112 = vld [vmem:[%s3 + $0xc] sm:$0xf]
    %v113 = vld [vmem:[%s3 + $0x10] sm:$0xf]
    %v114 = vld [vmem:[%s3 + $0x14] sm:$0xf]
    %v115 = vld [vmem:[%s3 + $0x18] sm:$0xf]
    %v116 = vld [vmem:[%s3 + $0x1c] sm:$0xf]
    %v117 = vld [vmem:[%s3 + $0x20] sm:$0xf]
    %v118 = vld [vmem:[%s3 + $0x24] sm:$0xf]
    %v119 = vld [vmem:[%s3 + $0x28] sm:$0xf]
    %v120 = vld [vmem:[%s3 + $0x2c] sm:$0xf]
    %v121 = vld [vmem:[%s3 + $0x30] sm:$0xf]
    %v122 = vld [vmem:[%s3 + $0x34] sm:$0xf]
    %v123 = vld [vmem:[%s3 + $0x38] sm:$0xf]
    %v124 = vld [vmem:[%s3 + $0x3c] sm:$0xf]
    %v125 = vld [vmem:[%s4] sm:$0x1]
    %v127 = vlaneseq
    %v128 = vshrl.u32 %v127, 7
    %v129 = vsub.s32 0, %v128
    %v130 = vrot.slane %v125, %v129
    %v148 = vunpack.c.l.b16 %v109
    %v149 = vunpack.c.l.b16 %v110
    %v150 = vunpack.c.l.b16 %v111
    %v151 = vunpack.c.l.b16 %v112
    %v152 = vunpack.c.l.b16 %v113
    %v153 = vunpack.c.l.b16 %v114
    %v154 = vunpack.c.l.b16 %v115
    %v155 = vunpack.c.l.b16 %v116
    %v156 = vunpack.c.l.b16 %v117
    %v157 = vunpack.c.l.b16 %v118
    %v158 = vunpack.c.l.b16 %v119
    %v159 = vunpack.c.l.b16 %v120
    %v160 = vunpack.c.l.b16 %v121
    %v161 = vunpack.c.l.b16 %v122
    %v162 = vunpack.c.l.b16 %v123
    %v163 = vunpack.c.l.b16 %v124
    %v164 = vpack.c.b16 %v149, %v148
    %v165 = vpack.c.b16 %v151, %v150
    %v166 = vpack.c.b16 %v153, %v152
    %v167 = vpack.c.b16 %v155, %v154
    %v168 = vpack.c.b16 %v157, %v156
    %v169 = vpack.c.b16 %v159, %v158
    %v170 = vpack.c.b16 %v161, %v160
    %v171 = vpack.c.b16 %v163, %v162
    %180 = vmatprep.subr.bf16.mxu0 0
    %181 = vmatpush1.bf16.msra.mxu0 %v164
    %182 = vmatprep.subr.bf16.mxu0 0
    %183 = vmatpush1.bf16.msra.mxu0 %v165
    %184 = vmatprep.subr.bf16.mxu0 0
    %185 = vmatpush1.bf16.msra.mxu0 %v166
    %186 = vmatprep.subr.bf16.mxu0 0
    %187 = vmatpush1.bf16.msra.mxu0 %v167
    %188 = vmatprep.subr.bf16.mxu0 0
    %189 = vmatpush1.bf16.msra.mxu0 %v168
    %190 = vmatprep.subr.bf16.mxu0 0
    %191 = vmatpush1.bf16.msra.mxu0 %v169
    %192 = vmatprep.subr.bf16.mxu0 0
    %193 = vmatpush1.bf16.msra.mxu0 %v170
    %194 = vmatprep.subr.bf16.mxu0 0
    %195 = vmatpush1.bf16.msra.mxu0 %v171
    %196 = vmatprep.subr.bf16.mxu0 0
    %197 = vmatpush1.bf16.msra.mxu0 0
    %198 = vmatprep.subr.bf16.mxu0 0
    %199 = vmatpush1.bf16.msra.mxu0 0
    %200 = vmatprep.subr.bf16.mxu0 0
    %201 = vmatpush1.bf16.msra.mxu0 0
    %202 = vmatprep.subr.bf16.mxu0 0
    %203 = vmatpush1.bf16.msra.mxu0 0
    %204 = vmatprep.subr.bf16.mxu0 0
    %205 = vmatpush1.bf16.msra.mxu0 0
    %206 = vmatprep.subr.bf16.mxu0 0
    %207 = vmatpush1.bf16.msra.mxu0 0
    %208 = vmatprep.subr.bf16.mxu0 0
    %209 = vmatpush1.bf16.msra.mxu0 0
    %210 = vmatprep.subr.bf16.mxu0 0
    %211 = vmatpush1.bf16.msra.mxu0 0
    %212 = vmatprep.mubr.bf16.mxu0 0
    %213 = vmatmul.mubr.bf16.gmra.mrb[0].mxu0 %v108
    %v214 = vpop.f32.mrb[0].mxu0
    %v215 = vadd.f32 %v130, %v214
    %v216 = vpop.f32.mrb[0].mxu0
    %v217 = vpop.f32.mrb[0].mxu0
    %v218 = vpop.f32.mrb[0].mxu0
    %219 = vdwg.mxu0
    %vm220 = vcmask 64512
    %221 = vst.msk [vmem:[#allocation2] sm:$0xff] %vm220, %v215
    // Predicated region
    $region22: #{neuronet1_forward.1} parent=1 // pred_check
      _
    $region23: #{neuronet1_forward.1} parent=1 // pred_check_branch
      %223 = sbr.rel (0) target = $region25
    $region24: #{neuronet1_forward.1} parent=1 // pred_region
      %s225 = ssub.s32 128, 128
      %226 = vsyncadd [#allocation3], %s225
      %s228 = sshll.u32 [#allocation2], 4
      %s229 = int_to_ptr.vmem [resolvable:$true] %s228
      %231 = dma.vmem_to_hbm [thread:$0]  %s229, 128, %s5, [#allocation3]
    $region25: #{neuronet1_forward.1} parent=1 // pred_fallthru
      _
    // Predicated region
    $region26: #{neuronet1_forward.1} parent=1 // pred_check
      _
    $region27: #{neuronet1_forward.1} parent=1 // pred_check_branch
      %233 = sbr.rel (0) target = $region29
    $region28: #{neuronet1_forward.1} parent=1 // pred_region
      %234 = dma.done [#allocation3], 128
    $region29: #{neuronet1_forward.1} parent=1 // pred_fallthru
      _
    %235 = vsyncpa [#allocation3], 1

</llo_original>
